<compile_context>
chip_gen: v7x
topology: tpu7x:2x2x1
jax: 0.10.0
libtpu: 0.0.40
codegen_flags: <defaults>
</compile_context>

<pallas_src>
import functools

import jax
import jax.numpy as jnp
from jax.experimental import pallas as pl
from jax.experimental.pallas import tpu as pltpu


def _round_up(x, m):
    return (x + m - 1) // m * m


def _vmem_capacity_bytes():
    try:
        return int(pltpu.get_tpu_info().vmem_capacity_bytes)
    except Exception:
        return 64 * 1024 * 1024   # conservative (v7x-sized) fallback


def _conv1d_kernel(xa_ref, xh_ref, w_ref, b_ref, o_ref, col_ref, *, K,
                   dilation, w_tile, c_in, c_out, b_tile, use_im2col,
                   precision):
    # xa_ref : (b_tile, c_in, w_tile)    main lane-dense input tile (width j)
    # xh_ref : (b_tile, c_in, halo_blk)  halo chunk right after tile j
    # w_ref  : (c_out, K*c_in)           k-major flattened weight
    # b_ref  : (c_out, 1)                bias column (zeros when bias is None)
    # o_ref  : (b_tile, c_out, w_tile)   lane-dense output tile (w_tile%128==0)
    # col_ref: (K*c_in, b_tile*w_tile)   im2col slab   | (2, c_in, w_tile) stage

    # Bias as a hoisted lane-broadcast + VPU add on the output: cheaper than
    # folding it into the contraction, which can force an extra MXU pass when
    # K*c_in already sits on the 128/256 contraction-tile boundary.
    bias = jnp.broadcast_to(b_ref[...], (c_out, w_tile))

    if use_im2col:
        # Build ONE im2col slab covering all b_tile batch rows (each batch in
        # its own 128-aligned lane band) with purely static copies, then issue
        # a single fused MXU matmul per grid step.
        for b in range(b_tile):
            band = b * w_tile
            for k in range(K):
                r0 = k * c_in
                split = k * dilation
                if split == 0:
                    col_ref[r0:r0 + c_in, band:band + w_tile] = xa_ref[b]
                else:
                    col_ref[r0:r0 + c_in, band:band + w_tile - split] = (
                        xa_ref[b, :, split:])
                    col_ref[r0:r0 + c_in,
                            band + w_tile - split:band + w_tile] = (
                        xh_ref[b, :, :split])
        res = jnp.dot(w_ref[...], col_ref[...],
                      preferred_element_type=jnp.float32, precision=precision)
        for b in range(b_tile):
            o_ref[b] = (res[:, b * w_tile:(b + 1) * w_tile]
                        + bias).astype(o_ref.dtype)
    else:
        # c_in alone fills an MXU contraction pass (or K == 1): skip the slab
        # (saves its VMEM + vld/vst traffic) and issue K accumulating dots.
        # The halo-stitch staging buffer alternates slots so tap k+1's copies
        # are not WAR-blocked on tap k's matmul.
        for b in range(b_tile):
            acc = bias
            for k in range(K):
                split = k * dilation
                wk = w_ref[:, k * c_in:(k + 1) * c_in]
                if split == 0:
                    xk = xa_ref[b]
                else:
                    slot = k & 1
                    col_ref[slot, :, :w_tile - split] = xa_ref[b, :, split:]
                    col_ref[slot, :, w_tile - split:] = xh_ref[b, :, :split]
                    xk = col_ref[slot]
                acc = acc + jnp.dot(xk if False else wk, xk,
                                    preferred_element_type=jnp.float32,
                                    precision=precision)
            o_ref[b] = acc.astype(o_ref.dtype)


def conv1d_opti(x, weight, bias=None, dilation=1, enable_bf16=False,
                b_tile=None, w_tile=None, use_im2col=None, precision=None):
    """Forward of Conv1dOpti's optimized path (stride=1, padding=0, groups=1).

    x: (N, C_in, W); weight: (C_out, C_in, K); bias: (C_out,) or None.
    enable_bf16 mirrors the module's enable_BF16 flag (same eligibility gate).
    precision (e.g. jax.lax.Precision.HIGHEST) may be set for strict fp32
    parity with the PyTorch reference on long contractions.
    """
    if isinstance(dilation, (tuple, list)):
        dilation = int(dilation[0])

    n, c_in, w = x.shape
    c_out, c_in_w, k = weight.shape
    assert c_in == c_in_w, "groups != 1 is not supported by this kernel"
    halo = dilation * (k - 1)
    w_out = w - halo
    assert w_out > 0
    ck = k * c_in

    # Same eligibility gate as Conv1dOpti.forward for the BF16 path.
    if enable_bf16:
        enable_bf16 = (w >= 2 * (k - 1) * dilation + 95 and w % 2 == 0
                       and c_out % 2 == 0 and c_in % 2 == 0)
    compute_dtype = jnp.bfloat16 if enable_bf16 else jnp.float32
    out_dtype = compute_dtype
    x = x.astype(compute_dtype)
    weight = weight.astype(compute_dtype)

    if use_im2col is None:
        # im2col only pays while c_in alone under-fills an MXU pass.
        use_im2col = (k > 1) and (c_in < 128)

    ds_in = jnp.dtype(compute_dtype).itemsize
    ds_out = jnp.dtype(out_dtype).itemsize

    # Per-generation VMEM budget (~96 MiB on 128-MiB v5e/v6e, ~48 MiB on v7x).
    vmem_cap = _vmem_capacity_bytes()
    vmem_limit = max(32 << 20, min(vmem_cap * 3 // 4, vmem_cap - (8 << 20)))
    budget = vmem_limit - (4 << 20)

    halo_blk = max(128, _round_up(halo, 128))   # halo-chunk block width
    w_out_128 = _round_up(w_out, 128)

    def step_vmem(bt, wt):
        xa = 2 * bt * c_in * wt * ds_in              # double-buffered main tile
        xh = 2 * bt * c_in * halo_blk * ds_in        # double-buffered halo tile
        wb = 2 * c_out * ck * ds_in + 2 * c_out * 4  # weight + bias
        ob = 2 * bt * c_out * wt * ds_out            # double-buffered output
        col = ck * bt * wt * ds_in if use_im2col else 2 * c_in * wt * ds_in
        res = bt * c_out * wt * 4                    # live matmul result
        return xa + xh + wb + ob + col + res

    # Width tile: as wide as possible (lane-dense stores, fewer grid steps,
    # MiB-sized DMAs) under the VMEM budget; multiple of halo_blk so the halo
    # chunk's block grid stays aligned with the main block grid.
    if w_tile is None:
        w_tile = min(w_out_128, 8192)
        while w_tile > 512 and step_vmem(1, w_tile) > budget:
            w_tile = _round_up(w_tile // 2, 128)
    w_tile = _round_up(max(min(int(w_tile), w_out_128), halo_blk), halo_blk)
    w_out_p = _round_up(w_out, w_tile)
    n_wb = w_out_p // w_tile
    halo_stride = w_tile // halo_blk

    # Batch tile: grow until each grid step moves O(MiB) of fresh data (to
    # amortize the ~0.35 us/step pipeline overhead) while staying in budget.
    if b_tile is None:
        b_tile = 1

        def fresh(bt):
            return bt * (c_in * (w_tile + halo_blk) * ds_in
                         + c_out * w_tile * ds_out)

        while b_tile < min(n, 8):
            nxt = min(b_tile * 2, n, 8)
            if fresh(b_tile) >= (2 << 20) or step_vmem(nxt, w_tile) > budget:
                break
            b_tile = nxt
    b_tile = max(1, min(int(b_tile), n))
    # Keep the total grid >= 2 so both TensorCores get work on megacore parts.
    if (-(-n // b_tile)) * n_wb < 2 and n >= 2:
        b_tile = -(-n // 2)
    n_steps = -(-n // b_tile)
    n_pad = n_steps * b_tile

    # Wrapper-side zero padding (skipped entirely when shapes already align).
    w_pad = w_out_p + halo_blk
    pad_n, pad_w = n_pad - n, w_pad - w
    x_p = (jnp.pad(x, ((0, pad_n), (0, 0), (0, pad_w)))
           if (pad_n or pad_w) else x)

    # Weight -> (C_out, K*C_in), k-major (matches the im2col slab row order).
    w2d = jnp.transpose(weight, (0, 2, 1)).reshape(c_out, ck)
    bias_col = (jnp.zeros((c_out, 1), jnp.float32) if bias is None
                else bias.astype(jnp.float32).reshape(c_out, 1))

    kernel = functools.partial(
        _conv1d_kernel, K=k, dilation=dilation, w_tile=w_tile, c_in=c_in,
        c_out=c_out, b_tile=b_tile, use_im2col=use_im2col, precision=precision)

    col_shape = (ck, b_tile * w_tile) if use_im2col else (2, c_in, w_tile)

    cost = pl.CostEstimate(
        flops=2 * n_pad * c_out * ck * w_out_p,
        transcendentals=0,
        bytes_accessed=(n_pad * c_in * w_pad * ds_in + c_out * ck * ds_in
                        + c_out * 4 + n_pad * c_out * w_out_p * ds_out))

    vmem_limit = int(min(max(vmem_limit,
                             step_vmem(b_tile, w_tile) + (4 << 20)), vmem_cap))

    out = pl.pallas_call(
        kernel,
        out_shape=jax.ShapeDtypeStruct((n_pad, c_out, w_out_p), out_dtype),
        grid_spec=pltpu.PrefetchScalarGridSpec(
            num_scalar_prefetch=0,
            grid=(n_steps, n_wb),
            in_specs=[
                # Main lane-dense input tile for width block j.
                pl.BlockSpec((b_tile, c_in, w_tile), lambda i, j: (i, 0, j)),
                # Halo chunk starting right after width block j (lets all
                # in-kernel slicing stay static).
                pl.BlockSpec((b_tile, c_in, halo_blk),
                             lambda i, j: (i, 0, (j + 1) * halo_stride)),
                pl.BlockSpec((c_out, ck), lambda i, j: (0, 0)),
                pl.BlockSpec((c_out, 1), lambda i, j: (0, 0)),
            ],
            out_specs=pl.BlockSpec((b_tile, c_out, w_tile),
                                   lambda i, j: (i, 0, j)),
            scratch_shapes=[pltpu.VMEM(col_shape, compute_dtype)],
        ),
        compiler_params=pltpu.CompilerParams(
            dimension_semantics=("parallel", "parallel"),
            vmem_limit_bytes=vmem_limit),
        cost_estimate=cost,
    )(x_p, x_p, w2d, bias_col)

    if n_pad != n or w_out_p != w_out:
        out = out[:n, :, :w_out]
    return out

    # TODO(synk): stride!=1 / padding!=0 / groups>1 / padding_mode!='zeros'
    # fall back to F.conv1d in the original module and are not implemented
    # here; backward (autograd) is also out of scope.


def conv1d_reference(x, weight, bias, dilation=1):
    """Pure-jnp f32 reference of the same valid dilated conv1d + bias."""
    n, c_in, w = x.shape
    c_out, _, k = weight.shape
    w_out = w - dilation * (k - 1)
    acc = jnp.zeros((n, c_out, w_out), jnp.float32)
    for kk in range(k):
        xs = x[:, :, kk * dilation:kk * dilation + w_out]
        acc = acc + jnp.einsum("oc,ncw->now", weight[:, :, kk], xs)
    return acc + bias.reshape(1, c_out, 1)


if __name__ == "__main__":
    key = jax.random.PRNGKey(0)

    def run_case(n, c_in, c_out, w, k, dil, case_key, atol=1e-5, rtol=1e-5,
                 **kwargs):
        kx, kw, kb = jax.random.split(case_key, 3)
        x = jax.random.normal(kx, (n, c_in, w), dtype=jnp.float32)
        # Deterministic params matching _ConvNd.reset_parameters bounds.
        fan_in = c_in * k
        bound = 1.0 / (fan_in ** 0.5)
        weight = jax.random.uniform(kw, (c_out, c_in, k), jnp.float32,
                                    -bound, bound)
        bias = jax.random.uniform(kb, (c_out,), jnp.float32, -bound, bound)

        out = jax.block_until_ready(
            conv1d_opti(x, weight, bias, dilation=dil, **kwargs))
        ref = conv1d_reference(x, weight, bias, dilation=dil)
        assert out.shape == (n, c_out, w - dil * (k - 1)), out.shape
        err = jnp.max(jnp.abs(out.astype(jnp.float32) - ref))
        assert jnp.allclose(out.astype(jnp.float32), ref,
                            atol=atol, rtol=rtol), float(err)

    keys = jax.random.split(key, 5)
    # Conv1dOpti(4, 8, kernel_size=3, dilation=2) on (N=2, C_in=4, W=32).
    run_case(2, 4, 8, 32, 3, 2, keys[0])
    # Odd batch / channels: batch-tile padding + fused multi-batch matmul.
    run_case(5, 6, 10, 45, 5, 1, keys[1])
    # Forced width tiling: 3 lane-dense width tiles + halo chunks.
    run_case(2, 4, 8, 300, 3, 2, keys[2], w_tile=128)
    # Direct (no-im2col) K-tap accumulation path.
    run_case(2, 8, 8, 64, 3, 1, keys[3], use_im2col=False)
    # bf16 operand path (enable_BF16=True analogue), looser tolerance.
    run_case(2, 16, 16, 128, 3, 1, keys[4], enable_bf16=True,
             atol=5e-2, rtol=5e-2)

    print("KERNEL_OK")
</pallas_src>

<mosaic_0001>
module attributes {stable_mosaic.version = 11 : i64} {
  func.func @_conv1d_kernel(%arg0: i32, %arg1: i32, %arg2: memref<1x4x128xf32, #tpu.memory_space<vmem>>, %arg3: memref<1x4x128xf32, #tpu.memory_space<vmem>>, %arg4: memref<8x12xf32, #tpu.memory_space<vmem>>, %arg5: memref<8x1xf32, #tpu.memory_space<vmem>>, %arg6: memref<1x8x128xf32, #tpu.memory_space<vmem>>, %arg7: memref<12x128xf32, #tpu.memory_space<vmem>>) attributes {dimension_semantics = [#tpu.dimension_semantics<parallel>, #tpu.dimension_semantics<parallel>], iteration_bounds = array<i64: 2, 1>, scalar_prefetch = 0 : i64, scratch_operands = 1 : i64, tpu.core_type = #tpu.core_type<tc>, window_params = [{transform_indices = @transform_0, window_bounds = array<i64: 1, 4, 128>}, {transform_indices = @transform_1, window_bounds = array<i64: 1, 4, 128>}, {pipeline_mode = #tpu.pipeline_mode<synchronous>, transform_indices = @transform_2, window_bounds = array<i64: 8, 12>}, {pipeline_mode = #tpu.pipeline_mode<synchronous>, transform_indices = @transform_3, window_bounds = array<i64: 8, 1>}, {transform_indices = @transform_4, window_bounds = array<i64: 1, 8, 128>}]} {
    %c0 = arith.constant 0 : index
    %c0_0 = arith.constant 0 : index
    %0 = vector.load %arg5[%c0, %c0_0] : memref<8x1xf32, #tpu.memory_space<vmem>>, vector<8x1xf32>
    %1 = vector.shape_cast %0 : vector<8x1xf32> to vector<8x1xf32>
    %2 = vector.broadcast %1 : vector<8x1xf32> to vector<8x128xf32>
    %c0_1 = arith.constant 0 : index
    %c0_2 = arith.constant 0 : index
    %c0_3 = arith.constant 0 : index
    %3 = vector.load %arg2[%c0_1, %c0_2, %c0_3] : memref<1x4x128xf32, #tpu.memory_space<vmem>>, vector<1x4x128xf32>
    %4 = vector.shape_cast %3 : vector<1x4x128xf32> to vector<4x128xf32>
    %c0_4 = arith.constant 0 : index
    %c0_5 = arith.constant 0 : index
    %5 = vector.load %arg7[%c0_4, %c0_5] : memref<12x128xf32, #tpu.memory_space<vmem>>, vector<4x128xf32>
    tpu.vector_store %arg7[%c0_4, %c0_5], %4 {strides = array<i32>} : memref<12x128xf32, #tpu.memory_space<vmem>>, vector<4x128xf32>,
    %c0_6 = arith.constant 0 : index
    %c0_7 = arith.constant 0 : index
    %c2 = arith.constant 2 : index
    %6 = vector.load %arg2[%c0_6, %c0_7, %c2] : memref<1x4x128xf32, #tpu.memory_space<vmem>>, vector<1x4x126xf32>
    %7 = vector.shape_cast %6 : vector<1x4x126xf32> to vector<4x126xf32>
    %c4 = arith.constant 4 : index
    %c0_8 = arith.constant 0 : index
    %8 = vector.load %arg7[%c4, %c0_8] : memref<12x128xf32, #tpu.memory_space<vmem>>, vector<4x126xf32>
    tpu.vector_store %arg7[%c4, %c0_8], %7 {strides = array<i32>} : memref<12x128xf32, #tpu.memory_space<vmem>>, vector<4x126xf32>,
    %c0_9 = arith.constant 0 : index
    %c0_10 = arith.constant 0 : index
    %c0_11 = arith.constant 0 : index
    %9 = vector.load %arg3[%c0_9, %c0_10, %c0_11] : memref<1x4x128xf32, #tpu.memory_space<vmem>>, vector<1x4x2xf32>
    %10 = vector.shape_cast %9 : vector<1x4x2xf32> to vector<4x2xf32>
    %c4_12 = arith.constant 4 : index
    %c126 = arith.constant 126 : index
    %11 = vector.load %arg7[%c4_12, %c126] : memref<12x128xf32, #tpu.memory_space<vmem>>, vector<4x2xf32>
    tpu.vector_store %arg7[%c4_12, %c126], %10 {strides = array<i32>} : memref<12x128xf32, #tpu.memory_space<vmem>>, vector<4x2xf32>,
    %c0_13 = arith.constant 0 : index
    %c0_14 = arith.constant 0 : index
    %c4_15 = arith.constant 4 : index
    %12 = vector.load %arg2[%c0_13, %c0_14, %c4_15] : memref<1x4x128xf32, #tpu.memory_space<vmem>>, vector<1x4x124xf32>
    %13 = vector.shape_cast %12 : vector<1x4x124xf32> to vector<4x124xf32>
    %c8 = arith.constant 8 : index
    %c0_16 = arith.constant 0 : index
    %14 = vector.load %arg7[%c8, %c0_16] : memref<12x128xf32, #tpu.memory_space<vmem>>, vector<4x124xf32>
    tpu.vector_store %arg7[%c8, %c0_16], %13 {strides = array<i32>} : memref<12x128xf32, #tpu.memory_space<vmem>>, vector<4x124xf32>,
    %c0_17 = arith.constant 0 : index
    %c0_18 = arith.constant 0 : index
    %c0_19 = arith.constant 0 : index
    %15 = vector.load %arg3[%c0_17, %c0_18, %c0_19] : memref<1x4x128xf32, #tpu.memory_space<vmem>>, vector<1x4x4xf32>
    %16 = vector.shape_cast %15 : vector<1x4x4xf32> to vector<4x4xf32>
    %c8_20 = arith.constant 8 : index
    %c124 = arith.constant 124 : index
    %17 = vector.load %arg7[%c8_20, %c124] : memref<12x128xf32, #tpu.memory_space<vmem>>, vector<4x4xf32>
    tpu.vector_store %arg7[%c8_20, %c124], %16 {strides = array<i32>} : memref<12x128xf32, #tpu.memory_space<vmem>>, vector<4x4xf32>,
    %c0_21 = arith.constant 0 : index
    %c0_22 = arith.constant 0 : index
    %18 = vector.load %arg4[%c0_21, %c0_22] : memref<8x12xf32, #tpu.memory_space<vmem>>, vector<8x12xf32>
    %c0_23 = arith.constant 0 : index
    %c0_24 = arith.constant 0 : index
    %19 = vector.load %arg7[%c0_23, %c0_24] : memref<12x128xf32, #tpu.memory_space<vmem>>, vector<12x128xf32>
    %cst = arith.constant dense<0.000000e+00> : vector<8x128xf32>
    %20 = tpu.matmul %18, %19, %cst {dimension_numbers = #tpu.dot_dimension_numbers<[1], [0], [0], [1], [0, 0, 1, 1], [], []>} : vector<8x12xf32>, vector<12x128xf32>, vector<8x128xf32> -> vector<8x128xf32>
    %21 = arith.addf %20, %2 : vector<8x128xf32>
    %c0_25 = arith.constant 0 : index
    %c0_26 = arith.constant 0 : index
    %c0_27 = arith.constant 0 : index
    %22 = vector.load %arg6[%c0_25, %c0_26, %c0_27] : memref<1x8x128xf32, #tpu.memory_space<vmem>>, vector<1x8x128xf32>
    %23 = vector.shape_cast %22 : vector<1x8x128xf32> to vector<8x128xf32>
    %24 = vector.shape_cast %21 : vector<8x128xf32> to vector<1x8x128xf32>
    tpu.vector_store %arg6[%c0_25, %c0_26, %c0_27], %24 {strides = array<i32>} : memref<1x8x128xf32, #tpu.memory_space<vmem>>, vector<1x8x128xf32>,
    return
  }
  func.func @transform_0(%arg0: i32, %arg1: i32) -> (i32, i32, i32) {
    %c0_i32 = arith.constant 0 : i32
    %c0_i32_0 = arith.constant 0 : i32
    return %arg0, %c0_i32, %arg1 : i32, i32, i32
  }
  func.func @transform_1(%arg0: i32, %arg1: i32) -> (i32, i32, i32) {
    %c1_i32 = arith.constant 1 : i32
    %0 = arith.addi %arg1, %c1_i32 : i32
    %c1_i32_0 = arith.constant 1 : i32
    %1 = arith.muli %0, %c1_i32_0 : i32
    %c0_i32 = arith.constant 0 : i32
    %c0_i32_1 = arith.constant 0 : i32
    return %arg0, %c0_i32, %1 : i32, i32, i32
  }
  func.func @transform_2(%arg0: i32, %arg1: i32) -> (i32, i32) {
    %c0_i32 = arith.constant 0 : i32
    %c0_i32_0 = arith.constant 0 : i32
    %c0_i32_1 = arith.constant 0 : i32
    return %c0_i32, %c0_i32_0 : i32, i32
  }
  func.func @transform_3(%arg0: i32, %arg1: i32) -> (i32, i32) {
    %c0_i32 = arith.constant 0 : i32
    %c0_i32_0 = arith.constant 0 : i32
    %c0_i32_1 = arith.constant 0 : i32
    return %c0_i32, %c0_i32_0 : i32, i32
  }
  func.func @transform_4(%arg0: i32, %arg1: i32) -> (i32, i32, i32) {
    %c0_i32 = arith.constant 0 : i32
    %c0_i32_0 = arith.constant 0 : i32
    return %arg0, %c0_i32, %arg1 : i32, i32, i32
  }
}

</mosaic_0001>

<llo_original>
// kernel: tpu_custom_call.1
$region0: #{tpu_custom_call.1}
  #allocation0 [shape = 'u32[]', space=smem, size = 0x4, offset = 0x4, fixed_abs, tag = 'smem constant byte address 0x4 - core index']
  #allocation1 [shape = 'u32[144,128]{1,0:T(1,128)}', space=vmem, size = 0x12000, scoped, tag = 'internal scratch']
  #allocation2 [shape = 'f32[12,128]{1,0:T(8,128)}', space=vmem, size = 0x2000, scoped, tag = 'scratch operand']
  %s0 = inlined_call_operand.hbm [shape: f32[2,4,256], index: 0, kind: input, shape index: {}]
  %s1 = inlined_call_operand.hbm [shape: f32[2,4,256], index: 1, kind: input, shape index: {}]
  %s2 = inlined_call_operand.vmem [shape: f32[8,12], index: 2, kind: input, shape index: {}]
  %s3 = inlined_call_operand.vmem [shape: f32[8,1], index: 3, kind: input, shape index: {}]
  %s4 = inlined_call_operand.hbm [shape: f32[2,8,128], index: 4, kind: output, shape index: {}]
  %s5 = sld [smem:[#allocation0]]
  $region57: #{tpu_custom_call.1} parent=0
    _
  %s7 = ssub.s32 1, %s5
  %s8 = scalar_select 0, %s7, %s5
  $region1: #{tpu_custom_call.1} parent=0
    #allocation3 [shape = 'u8[4096]{0}', space=vmem, size = 0x1000, scoped, tag = 'input window, operand 0']
    #allocation4 [shape = 's32[2]{0}', space=sflag, size = 0x8, scoped, tag = 'scoped memory for tpu_custom_call.1']
    #allocation5 [shape = 's32[2]{0}', space=sflag, size = 0x8, scoped, tag = 'scoped memory for tpu_custom_call.1']
    #allocation6 [shape = 'u8[4096]{0}', space=vmem, size = 0x1000, scoped, tag = 'input window, operand 1']
    #allocation7 [shape = 's32[2]{0}', space=sflag, size = 0x8, scoped, tag = 'scoped memory for tpu_custom_call.1']
    #allocation8 [shape = 'u8[8192]{0}', space=vmem, size = 0x2000, scoped, tag = 'output window, operand 0']
    %9 = vsyncpa [#allocation4], 0
    %s10 = scalar_lea.sflag [#allocation4], 1
    %11 = vsyncpa %s10, 0
    %12 = vsyncpa [#allocation7], 0
    %s13 = scalar_lea.sflag [#allocation7], 1
    %14 = vsyncpa %s13, 0
    %15 = vsyncpa [#allocation5], 0
    %s16 = scalar_lea.sflag [#allocation5], 1
    %17 = vsyncpa %s16, 0
    loop: start=0, step=1, limit=4
    $region2: #{tpu_custom_call.1} parent=1 // loop_pre_header
      _
    $region3: #{tpu_custom_call.1} parent=1 // loop_header
      %s19 = sphi 0, %s23
      %p20 = scmp.ge.s32.totalorder %s19, 4
      %s26 = sphi 0, %s38
      %s27 = sphi 0, %s34
      %s28 = sphi 0, %s26
      %s29 = sphi 0, %s27
      %s30 = sphi 0, %s28
      %s31 = sphi 0, %s29
      %s43 = sphi 0, %s45
      %s46 = sphi 0, %s43
      %s47 = sphi 0, %s46
      %s63 = sphi 0, %s47
      %s73 = sphi 0, %s75
      %s76 = sphi 0, %s73
      %s77 = sphi 0, %s76
      %s93 = sphi 0, %s77
      %s97 = sphi 0, %s97
      %s99 = sphi 0, %s97
      %s100 = sphi 0, %s99
      %s114 = sphi 0, %s100
      %s118 = sphi 0, %s118
      %s120 = sphi 0, %s118
      %s121 = sphi 0, %s120
      %s135 = sphi 0, %s121
      %s143 = sphi 0, %s145
      %s146 = sphi 0, %s143
      %s147 = sphi 0, %s146
      %s163 = sphi 0, %s147
    $region4: #{tpu_custom_call.1} parent=1 // loop_header_branch
      %22 = sbr.rel (%p20) target = $region8
    $region5: #{tpu_custom_call.1} parent=1 // loop_body
      %s24 = ssub.s32 %s19, 1
      %s25 = ssub.s32 %s19, 2
      %s32 = sadd.s32 1, %s27
      %p33 = scmp.ge.s32.totalorder %s32, 1
      %s34 = scalar_select %p33, 0, %s32
      %s35 = sadd.s32 1, %s26
      %s36 = scalar_select %p33, %s35, %s26
      %p37 = scmp.ge.s32.totalorder %s36, 2
      %s38 = scalar_select %p37, 0, %s36
      %s39 = ssub.s32 %s26, %s38
      %s40 = ssub.s32 %s27, %s34
      %s41 = sor.u32 %s39, %s40
      %p42 = scmp.eq.s32.totalorder %s41, 0
      %s44 = sadd.s32 %s43, 1
      %s45 = scalar_select %p42, %s43, %s44
      %p48 = pneg %p42
      %p49 = scmp.eq.s32.totalorder %s19, 1
      %p50 = por %p48, %p49
      %p51 = scmp.ne.s32.totalorder %s43, %s46
      %p52 = scmp.eq.s32.totalorder %s19, 0
      %p53 = por %p51, %p52
      %p54 = scmp.ne.s32.totalorder %s43, %s46
      %p55 = scmp.eq.s32.totalorder %s24, 1
      %p56 = por %p54, %p55
      %p57 = scmp.ne.s32.totalorder %s46, %s47
      %p58 = scmp.eq.s32.totalorder %s24, 0
      %p59 = por %p57, %p58
      %p60 = scmp.ne.s32.totalorder %s46, %s47
      %p61 = scmp.eq.s32.totalorder %s25, 1
      %p62 = por %p60, %p61
      %p64 = scmp.ne.s32.totalorder %s47, %s63
      %p65 = scmp.eq.s32.totalorder %s25, 0
      %p66 = por %p64, %p65
      %s67 = sadd.s32 %s27, 1
      %s68 = sadd.s32 %s34, 1
      %s69 = ssub.s32 %s26, %s38
      %s70 = ssub.s32 %s67, %s68
      %s71 = sor.u32 %s69, %s70
      %p72 = scmp.eq.s32.totalorder %s71, 0
      %s74 = sadd.s32 %s73, 1
      %s75 = scalar_select %p72, %s73, %s74
      %p78 = pneg %p72
      %p79 = scmp.eq.s32.totalorder %s19, 1
      %p80 = por %p78, %p79
      %p81 = scmp.ne.s32.totalorder %s73, %s76
      %p82 = scmp.eq.s32.totalorder %s19, 0
      %p83 = por %p81, %p82
      %p84 = scmp.ne.s32.totalorder %s73, %s76
      %p85 = scmp.eq.s32.totalorder %s24, 1
      %p86 = por %p84, %p85
      %p87 = scmp.ne.s32.totalorder %s76, %s77
      %p88 = scmp.eq.s32.totalorder %s24, 0
      %p89 = por %p87, %p88
      %p90 = scmp.ne.s32.totalorder %s76, %s77
      %p91 = scmp.eq.s32.totalorder %s25, 1
      %p92 = por %p90, %p91
      %p94 = scmp.ne.s32.totalorder %s77, %s93
      %p95 = scmp.eq.s32.totalorder %s25, 0
      %p96 = por %p94, %p95
      %s98 = sadd.s32 %s97, 1
      %p101 = scmp.eq.s32.totalorder %s19, 1
      %p102 = scmp.ne.s32.totalorder %s97, %s99
      %p103 = scmp.eq.s32.totalorder %s19, 0
      %p104 = por %p102, %p103
      %p105 = scmp.ne.s32.totalorder %s97, %s99
      %p106 = scmp.eq.s32.totalorder %s24, 1
      %p107 = por %p105, %p106
      %p108 = scmp.ne.s32.totalorder %s99, %s100
      %p109 = scmp.eq.s32.totalorder %s24, 0
      %p110 = por %p108, %p109
      %p111 = scmp.ne.s32.totalorder %s99, %s100
      %p112 = scmp.eq.s32.totalorder %s25, 1
      %p113 = por %p111, %p112
      %p115 = scmp.ne.s32.totalorder %s100, %s114
      %p116 = scmp.eq.s32.totalorder %s25, 0
      %p117 = por %p115, %p116
      %s119 = sadd.s32 %s118, 1
      %p122 = scmp.eq.s32.totalorder %s19, 1
      %p123 = scmp.ne.s32.totalorder %s118, %s120
      %p124 = scmp.eq.s32.totalorder %s19, 0
      %p125 = por %p123, %p124
      %p126 = scmp.ne.s32.totalorder %s118, %s120
      %p127 = scmp.eq.s32.totalorder %s24, 1
      %p128 = por %p126, %p127
      %p129 = scmp.ne.s32.totalorder %s120, %s121
      %p130 = scmp.eq.s32.totalorder %s24, 0
      %p131 = por %p129, %p130
      %p132 = scmp.ne.s32.totalorder %s120, %s121
      %p133 = scmp.eq.s32.totalorder %s25, 1
      %p134 = por %p132, %p133
      %p136 = scmp.ne.s32.totalorder %s121, %s135
      %p137 = scmp.eq.s32.totalorder %s25, 0
      %p138 = por %p136, %p137
      %s139 = ssub.s32 %s26, %s38
      %s140 = ssub.s32 %s27, %s34
      %s141 = sor.u32 %s139, %s140
      %p142 = scmp.eq.s32.totalorder %s141, 0
      %s144 = sadd.s32 %s143, 1
      %s145 = scalar_select %p142, %s143, %s144
      %p148 = pneg %p142
      %p149 = scmp.eq.s32.totalorder %s19, 1
      %p150 = por %p148, %p149
      %p151 = scmp.ne.s32.totalorder %s143, %s146
      %p152 = scmp.eq.s32.totalorder %s19, 0
      %p153 = por %p151, %p152
      %p154 = scmp.ne.s32.totalorder %s143, %s146
      %p155 = scmp.eq.s32.totalorder %s24, 1
      %p156 = por %p154, %p155
      %p157 = scmp.ne.s32.totalorder %s146, %s147
      %p158 = scmp.eq.s32.totalorder %s24, 0
      %p159 = por %p157, %p158
      %p160 = scmp.ne.s32.totalorder %s146, %s147
      %p161 = scmp.eq.s32.totalorder %s25, 1
      %p162 = por %p160, %p161
      %p164 = scmp.ne.s32.totalorder %s147, %s163
      %p165 = scmp.eq.s32.totalorder %s25, 0
      %p166 = por %p164, %p165
      %p167 = scmp.le.s32.totalorder 1, %s19
      %p168 = scmp.lt.s32.totalorder %s19, 3
      %p169 = pnand %p167, %p168
      %p170 = pneg %p169
      // Predicated region
      $region9: #{tpu_custom_call.1} parent=5 // pred_check
        _
      $region10: #{tpu_custom_call.1} parent=5 // pred_check_branch
        %172 = sbr.rel (%p169) target = $region12
      $region11: #{tpu_custom_call.1} parent=5 // pred_region
        %s173 = ssub.s32 %s19, 1
        // Predicated region
        $region13: #{tpu_custom_call.1} parent=11 // pred_check
          %p174 = pneg %p110
        $region14: #{tpu_custom_call.1} parent=11 // pred_check_branch
          %176 = sbr.rel (%p174) target = $region16
        $region15: #{tpu_custom_call.1} parent=11 // pred_region
          _
        $region16: #{tpu_custom_call.1} parent=11 // pred_fallthru
          _
        // Predicated region
        $region17: #{tpu_custom_call.1} parent=11 // pred_check
          %p177 = pneg %p131
        $region18: #{tpu_custom_call.1} parent=11 // pred_check_branch
          %179 = sbr.rel (%p177) target = $region20
        $region19: #{tpu_custom_call.1} parent=11 // pred_region
          _
        $region20: #{tpu_custom_call.1} parent=11 // pred_fallthru
          _
      $region12: #{tpu_custom_call.1} parent=5 // pred_fallthru
        _
      %p180 = scmp.lt.s32.totalorder %s19, 2
      // Predicated region
      $region21: #{tpu_custom_call.1} parent=5 // pred_check
        %p181 = pneg %p180
      $region22: #{tpu_custom_call.1} parent=5 // pred_check_branch
        %183 = sbr.rel (%p181) target = $region24
      $region23: #{tpu_custom_call.1} parent=5 // pred_region
        // Predicated region
        $region25: #{tpu_custom_call.1} parent=23 // pred_check
          %p184 = pneg %p53
        $region26: #{tpu_custom_call.1} parent=23 // pred_check_branch
          %186 = sbr.rel (%p184) target = $region28
        $region27: #{tpu_custom_call.1} parent=23 // pred_region
          %s187 = sand.u32 %s43, 1
          %s188 = scalar_lea.sflag [#allocation4], %s187
          %s189 = sand.u32 %s43, 1
          %s190 = smul.addr %s189, 4
          %s191 = scalar_lea.vmem [#allocation3], %s190
          %s193 = ssub.s32 64, 64
          %194 = vsyncadd %s188, %s193
          %s195 = smul.addr %s26, 2
          %s196 = sadd.s32 %s27, %s195
          %s197 = smul.addr %s196, 64
          %s198 = scalar_lea.hbm %s0, %s197
          %s200 = sshll.u32 %s191, 4
          %s201 = int_to_ptr.vmem [resolvable:$true] %s200
          %203 = dma.hbm_to_vmem [thread:$0]  %s198, 64, %s201, %s188
        $region28: #{tpu_custom_call.1} parent=23 // pred_fallthru
          _
        // Predicated region
        $region29: #{tpu_custom_call.1} parent=23 // pred_check
          %p204 = pneg %p83
        $region30: #{tpu_custom_call.1} parent=23 // pred_check_branch
          %206 = sbr.rel (%p204) target = $region32
        $region31: #{tpu_custom_call.1} parent=23 // pred_region
          %s207 = sand.u32 %s73, 1
          %s208 = scalar_lea.sflag [#allocation7], %s207
          %s209 = sand.u32 %s73, 1
          %s210 = smul.addr %s209, 4
          %s211 = scalar_lea.vmem [#allocation6], %s210
          %s212 = sadd.s32 %s27, 1
          %s214 = ssub.s32 64, 64
          %215 = vsyncadd %s208, %s214
          %s216 = smul.addr %s26, 2
          %s217 = sadd.s32 %s212, %s216
          %s218 = smul.addr %s217, 64
          %s219 = scalar_lea.hbm %s1, %s218
          %s221 = sshll.u32 %s211, 4
          %s222 = int_to_ptr.vmem [resolvable:$true] %s221
          %224 = dma.hbm_to_vmem [thread:$0]  %s219, 64, %s222, %s208
        $region32: #{tpu_custom_call.1} parent=23 // pred_fallthru
          _
      $region24: #{tpu_custom_call.1} parent=5 // pred_fallthru
        _
      %p225 = scmp.le.s32.totalorder 1, %s19
      %p226 = scmp.lt.s32.totalorder %s19, 3
      %p227 = pnand %p225, %p226
      %p228 = pneg %p227
      // Predicated region
      $region33: #{tpu_custom_call.1} parent=5 // pred_check
        _
      $region34: #{tpu_custom_call.1} parent=5 // pred_check_branch
        %230 = sbr.rel (%p227) target = $region36
      $region35: #{tpu_custom_call.1} parent=5 // pred_region
        %s231 = ssub.s32 %s19, 1
        %s232 = sand.u32 %s46, 1
        %s233 = scalar_lea.sflag [#allocation4], %s232
        %s234 = sand.u32 %s46, 1
        %s235 = smul.addr %s234, 4
        %s236 = scalar_lea.vmem [#allocation3], %s235
        // Predicated region
        $region37: #{tpu_custom_call.1} parent=35 // pred_check
          %p237 = pneg %p59
        $region38: #{tpu_custom_call.1} parent=35 // pred_check_branch
          %239 = sbr.rel (%p237) target = $region40
        $region39: #{tpu_custom_call.1} parent=35 // pred_region
          %240 = dma.done %s233, 64
        $region40: #{tpu_custom_call.1} parent=35 // pred_fallthru
          _
        %s241 = sand.u32 %s76, 1
        %s242 = scalar_lea.sflag [#allocation7], %s241
        %s243 = sand.u32 %s76, 1
        %s244 = smul.addr %s243, 4
        %s245 = scalar_lea.vmem [#allocation6], %s244
        // Predicated region
        $region41: #{tpu_custom_call.1} parent=35 // pred_check
          %p246 = pneg %p89
        $region42: #{tpu_custom_call.1} parent=35 // pred_check_branch
          %248 = sbr.rel (%p246) target = $region44
        $region43: #{tpu_custom_call.1} parent=35 // pred_region
          %249 = dma.done %s242, 64
        $region44: #{tpu_custom_call.1} parent=35 // pred_fallthru
          _
        %s250 = sand.u32 %s46, 1
        %s251 = scalar_lea.sflag [#allocation4], %s250
        %s252 = sand.u32 %s46, 1
        %s253 = smul.addr %s252, 4
        %s254 = scalar_lea.vmem [#allocation3], %s253
        %p255 = pneg %p59
        %p256 = pneg %p56
        %s257 = sand.u32 %s76, 1
        %s258 = scalar_lea.sflag [#allocation7], %s257
        %s259 = sand.u32 %s76, 1
        %s260 = smul.addr %s259, 4
        %s261 = scalar_lea.vmem [#allocation6], %s260
        %p262 = pneg %p89
        %p263 = pneg %p86
        %p264 = pneg %p110
        %p265 = pneg %p107
        %p266 = pneg %p131
        %p267 = pneg %p128
        %p268 = pneg %p159
        %p269 = pneg %p156
        %s270 = sand.u32 %s146, 1
        %s271 = scalar_lea.sflag [#allocation5], %s270
        %s272 = sand.u32 %s146, 1
        %s273 = smul.addr %s272, 8
        %s274 = scalar_lea.vmem [#allocation8], %s273
        %s275 = sadd.s32 %s29, 1
        %v276 = vld [vmem:[%s3] sm:$0xff]
        %278 = vset.pattern.permute.xlu0 0
        %279 = vperm.xlu0 %278, %v276
        %v280 = vpop.permute.xlu0 %279
        %v282 = vld [vmem:[%s236] sm:$0xf]
        %283 = vst [vmem:[#allocation2] sm:$0xf] %v282
        %v284 = vld [vmem:[%s236] sm:$0xf]
        %286 = vrot.lane.b32.xlu0 %v284, 126
        %v287 = vpop.permute.xlu0 %286
        %vm289 = vcmask 1027072
        %290 = vst.msk [vmem:[#allocation2 + $0x4] sm:$0xf] %vm289, %v287
        %v291 = vld [vmem:[%s245] sm:$0xf]
        %293 = vrot.lane.b32.xlu0 %v291, 126
        %v294 = vpop.permute.xlu0 %293
        %vm296 = vcmask 1044464
        %297 = vst.msk [vmem:[#allocation2 + $0x4] sm:$0xf] %vm296, %v294
        %v298 = vld [vmem:[%s236] sm:$0xf]
        %300 = vrot.lane.b32.xlu0 %v298, 124
        %v301 = vpop.permute.xlu0 %300
        %vm303 = vcmask 1010688
        %304 = vst.msk [vmem:[#allocation2 + $0x8] sm:$0xf] %vm303, %v301
        %v305 = vld [vmem:[%s245] sm:$0xf]
        %307 = vrot.lane.b32.xlu0 %v305, 124
        %v308 = vpop.permute.xlu0 %307
        %vm310 = vcmask 1044448
        %311 = vst.msk [vmem:[#allocation2 + $0x8] sm:$0xf] %vm310, %v308
        %v312 = vld [vmem:[%s2] sm:$0xff]
        %v313 = vld [vmem:[#allocation2] sm:$0xff]
        %v314 = vld [vmem:[#allocation2 + $0x8] sm:$0xf]
        %vm315 = vcmask 97280
        %v317 = vsel %vm315, %v312, 0
        %vm319 = vcmask 1043456
        %v321 = vsel %vm319, %v314, 0
        %323 = vmatprep.subr.mxu0 0.0
        %324 = vmatpush1.msra.mxu0 %v313
        %325 = vmatprep.subr.mxu0 0.0
        %326 = vmatpush1.msra.mxu0 %v321
        %327 = vmatprep.subr.mxu0 0.0
        %328 = vmatpush1.msra.mxu0 0.0
        %329 = vmatprep.subr.mxu0 0.0
        %330 = vmatpush1.msra.mxu0 0.0
        %331 = vmatprep.subr.mxu0 0.0
        %332 = vmatpush1.msra.mxu0 0.0
        %333 = vmatprep.subr.mxu0 0.0
        %334 = vmatpush1.msra.mxu0 0.0
        %335 = vmatprep.subr.mxu0 0.0
        %336 = vmatpush1.msra.mxu0 0.0
        %337 = vmatprep.subr.mxu0 0.0
        %338 = vmatpush1.msra.mxu0 0.0
        %339 = vmatprep.subr.mxu0 0.0
        %340 = vmatpush1.msra.mxu0 0.0
        %341 = vmatprep.subr.mxu0 0.0
        %342 = vmatpush1.msra.mxu0 0.0
        %343 = vmatprep.subr.mxu0 0.0
        %344 = vmatpush1.msra.mxu0 0.0
        %345 = vmatprep.subr.mxu0 0.0
        %346 = vmatpush1.msra.mxu0 0.0
        %347 = vmatprep.subr.mxu0 0.0
        %348 = vmatpush1.msra.mxu0 0.0
        %349 = vmatprep.subr.mxu0 0.0
        %350 = vmatpush1.msra.mxu0 0.0
        %351 = vmatprep.subr.mxu0 0.0
        %352 = vmatpush1.msra.mxu0 0.0
        %353 = vmatprep.subr.mxu0 0.0
        %354 = vmatpush1.msra.mxu0 0.0
        %355 = vmatprep.subr.mxu0 0.0
        %356 = vmatpush1.msra.mxu0 0.0
        %357 = vmatprep.subr.mxu0 0.0
        %358 = vmatpush1.msra.mxu0 0.0
        %359 = vmatprep.subr.mxu0 0.0
        %360 = vmatpush1.msra.mxu0 0.0
        %361 = vmatprep.subr.mxu0 0.0
        %362 = vmatpush1.msra.mxu0 0.0
        %363 = vmatprep.subr.mxu0 0.0
        %364 = vmatpush1.msra.mxu0 0.0
        %365 = vmatprep.subr.mxu0 0.0
        %366 = vmatpush1.msra.mxu0 0.0
        %367 = vmatprep.subr.mxu0 0.0
        %368 = vmatpush1.msra.mxu0 0.0
        %369 = vmatprep.subr.mxu0 0.0
        %370 = vmatpush1.msra.mxu0 0.0
        %371 = vmatprep.subr.mxu0 0.0
        %372 = vmatpush1.msra.mxu0 0.0
        %373 = vmatprep.subr.mxu0 0.0
        %374 = vmatpush1.msra.mxu0 0.0
        %375 = vmatprep.subr.mxu0 0.0
        %376 = vmatpush1.msra.mxu0 0.0
        %377 = vmatprep.subr.mxu0 0.0
        %378 = vmatpush1.msra.mxu0 0.0
        %379 = vmatprep.subr.mxu0 0.0
        %380 = vmatpush1.msra.mxu0 0.0
        %381 = vmatprep.subr.mxu0 0.0
        %382 = vmatpush1.msra.mxu0 0.0
        %383 = vmatprep.subr.mxu0 0.0
        %384 = vmatpush1.msra.mxu0 0.0
        %385 = vmatprep.subr.mxu0 0.0
        %386 = vmatpush1.msra.mxu0 0.0
        %387 = vmatprep.mubr.f32.mxu0 0.0
        %388 = vmatmul.mubr.f32.gmra.mrb[0].mxu0 %v317
        %v389 = vpop.f32.mrb[0].mxu0
        %v390 = vadd.f32 %v280, %v389
        %v391 = vpop.f32.mrb[0].mxu0
        %392 = vdwg.mxu0
        %393 = vst [vmem:[%s274] sm:$0xff] %v390
        %s394 = sand.u32 %s146, 1
        %s395 = scalar_lea.sflag [#allocation5], %s394
        %s396 = sand.u32 %s146, 1
        %s397 = smul.addr %s396, 8
        %s398 = scalar_lea.vmem [#allocation8], %s397
        // Predicated region
        $region45: #{tpu_custom_call.1} parent=35 // pred_check
          %p399 = pneg %p156
        $region46: #{tpu_custom_call.1} parent=35 // pred_check_branch
          %401 = sbr.rel (%p399) target = $region48
        $region47: #{tpu_custom_call.1} parent=35 // pred_region
          %s403 = ssub.s32 128, 128
          %404 = vsyncadd %s395, %s403
          %s405 = sadd.s32 %s29, %s28
          %s406 = smul.addr %s405, 128
          %s407 = scalar_lea.hbm %s4, %s406
          %s409 = sshll.u32 %s398, 4
          %s410 = int_to_ptr.vmem [resolvable:$true] %s409
          %412 = dma.vmem_to_hbm [thread:$0]  %s410, 128, %s407, %s395
        $region48: #{tpu_custom_call.1} parent=35 // pred_fallthru
          _
      $region36: #{tpu_custom_call.1} parent=5 // pred_fallthru
        _
      %p413 = scmp.le.s32.totalorder 2, %s19
      // Predicated region
      $region49: #{tpu_custom_call.1} parent=5 // pred_check
        %p414 = pneg %p413
      $region50: #{tpu_custom_call.1} parent=5 // pred_check_branch
        %416 = sbr.rel (%p414) target = $region52
      $region51: #{tpu_custom_call.1} parent=5 // pred_region
        %s417 = ssub.s32 %s19, 2
        // Predicated region
        $region53: #{tpu_custom_call.1} parent=51 // pred_check
          %p418 = pneg %p162
        $region54: #{tpu_custom_call.1} parent=51 // pred_check_branch
          %420 = sbr.rel (%p418) target = $region56
        $region55: #{tpu_custom_call.1} parent=51 // pred_region
          %s421 = sand.u32 %s147, 1
          %s422 = scalar_lea.sflag [#allocation5], %s421
          %s423 = sand.u32 %s147, 1
          %s424 = smul.addr %s423, 8
          %s425 = scalar_lea.vmem [#allocation8], %s424
          %426 = dma.done %s422, 128
        $region56: #{tpu_custom_call.1} parent=51 // pred_fallthru
          _
      $region52: #{tpu_custom_call.1} parent=5 // pred_fallthru
        _
    $region6: #{tpu_custom_call.1} parent=1 // loop_footer
      %s23 = sadd.s32 1, %s19
    $region7: #{tpu_custom_call.1} parent=1 // loop_footer_branch
      %18 = sbr.rel target = $region3
    $region8: #{tpu_custom_call.1} parent=1 // loop_exit
      _
    %427 = vsyncpa [#allocation4], 1
    %s428 = scalar_lea.sflag [#allocation4], 1
    %429 = vsyncpa %s428, 1
    %430 = vsyncpa [#allocation7], 1
    %s431 = scalar_lea.sflag [#allocation7], 1
    %432 = vsyncpa %s431, 1
    %433 = vsyncpa [#allocation5], 1
    %s434 = scalar_lea.sflag [#allocation5], 1
    %435 = vsyncpa %s434, 1

</llo_original>
